<compile_context>
chip_gen: v6e
topology: v6e:2x2x1
jax: 0.10.0
libtpu: 0.0.40
codegen_flags: <defaults>
</compile_context>

<pallas_src>
import math
from functools import partial

import jax
import jax.numpy as jnp
from jax import lax
from jax.experimental import pallas as pl
from jax.experimental.pallas import tpu as pltpu

MATMUL_DTYPE = jnp.bfloat16
# Large finite negative instead of -inf: exp() underflows to exactly 0 and no
# inf/NaN arithmetic can occur even for rows fully masked within one KV tile.
MASK_VALUE = -0.7 * float(jnp.finfo(jnp.float32).max)


def _round_up(x, m):
    return ((x + m - 1) // m) * m


def _pad_axis(x, axis, target):
    pad = target - x.shape[axis]
    if pad <= 0:
        return x
    widths = [(0, 0)] * x.ndim
    widths[axis] = (0, pad)
    return jnp.pad(x, widths)


def _vmem_limit_bytes():
    """~3/4 of per-core VMEM (v5e/v6e 128 MiB -> 96 MiB, v7x 64 MiB -> 48 MiB)."""
    try:
        cap = pltpu.get_tpu_info().vmem_capacity_bytes
    except Exception:
        cap = 64 << 20
    return int(min((cap * 3) // 4, 96 << 20))


def _flash_attention_kernel(q_ref, k_ref, v_ref, o_ref, m_ref, l_ref, acc_ref,
                            *, causal, block_q, block_k, kv_len):
    """Online-softmax step for one (batch, q-tile, kv-tile) grid point.

    Head-major blocks: q_ref (1,H,TQ,E) bf16 (scale pre-folded), k_ref (1,H,TK,E),
    v_ref (1,H,TK,D), o_ref (1,H,TQ,D).  Scratch persists across the innermost
    "arbitrary" KV axis: m_ref/l_ref (H,TQ,1) f32, acc_ref (H,TQ,D) f32.
    """
    ki = pl.program_id(2)
    q0 = pl.program_id(1) * block_q
    k0 = ki * block_k

    @pl.when(ki == 0)
    def _init():
        m_ref[...] = jnp.full(m_ref.shape, -jnp.inf, m_ref.dtype)
        l_ref[...] = jnp.zeros(l_ref.shape, l_ref.dtype)
        acc_ref[...] = jnp.zeros(acc_ref.shape, acc_ref.dtype)

    def _compute():
        q = q_ref[0]                                         # (H, TQ, E)
        k = k_ref[0]                                         # (H, TK, E)
        v = v_ref[0]                                         # (H, TK, D)
        # Batched over heads on the MXU, f32 accumulation.
        s = jnp.einsum('hqe,hke->hqk', q, k,
                       preferred_element_type=jnp.float32)   # (H, TQ, TK)

        need_kv_pad = (kv_len % block_k) != 0
        if causal or need_kv_pad:
            # 2-D mask, broadcast over heads (H-fold fewer iota/VALU ops).
            col = k0 + lax.broadcasted_iota(jnp.int32, (block_q, block_k), 1)
            if causal:
                row = q0 + lax.broadcasted_iota(jnp.int32, (block_q, block_k), 0)
                keep = col <= row
                if need_kv_pad:
                    keep = jnp.logical_and(keep, col < kv_len)
            else:
                keep = col < kv_len
            s = jnp.where(keep[None, :, :], s, MASK_VALUE)

        m_prev = m_ref[...]
        m_new = jnp.maximum(m_prev, jnp.max(s, axis=-1, keepdims=True))
        alpha = jnp.exp(m_prev - m_new)
        p = jnp.exp(s - m_new)                               # un-normalized probs
        l_ref[...] = alpha * l_ref[...] + jnp.sum(p, axis=-1, keepdims=True)
        acc_ref[...] = alpha * acc_ref[...] + jnp.einsum(
            'hqk,hkd->hqd', p.astype(v.dtype), v,
            preferred_element_type=jnp.float32)
        m_ref[...] = m_new

    if causal:
        # Skip KV tiles entirely above the diagonal (~2x fewer MXU flops).
        pl.when(k0 <= q0 + block_q - 1)(_compute)
    else:
        _compute()

    @pl.when(ki == pl.num_programs(2) - 1)
    def _finalize():
        # Deferred normalization: one (H,TQ,D) multiply instead of (H,TQ,S).
        o_ref[0] = (acc_ref[...] *
                    pl.reciprocal(l_ref[...], approx=True)).astype(o_ref.dtype)
    # TODO(synk): attention dropout (p=0.1) is identity here (inference mode).


def _full_attention_kernel(q_ref, k_ref, v_ref, o_ref, a_ref, *, causal, block_q):
    """Whole-S path used only when output_attention=True (A must be normalized)."""
    q = q_ref[0]                                             # (H, TQ, E) bf16, pre-scaled
    k = k_ref[0]                                             # (H, S,  E) bf16
    v = v_ref[0]                                             # (H, S,  D) bf16
    s = jnp.einsum('hqe,hke->hqk', q, k,
                   preferred_element_type=jnp.float32)       # (H, TQ, S)

    if causal:
        kv = s.shape[-1]
        q0 = pl.program_id(1) * block_q
        row = q0 + lax.broadcasted_iota(jnp.int32, (block_q, kv), 0)
        col = lax.broadcasted_iota(jnp.int32, (block_q, kv), 1)
        s = jnp.where((col <= row)[None, :, :], s, MASK_VALUE)

    m = jnp.max(s, axis=-1, keepdims=True)
    e = jnp.exp(s - m)
    a = e * pl.reciprocal(jnp.sum(e, axis=-1, keepdims=True), approx=True)
    # TODO(synk): attention dropout (p=0.1) is identity here (inference mode).
    o = jnp.einsum('hqk,hkd->hqd', a.astype(v.dtype), v,
                   preferred_element_type=jnp.float32)
    o_ref[0] = o.astype(o_ref.dtype)
    a_ref[0] = a.astype(a_ref.dtype)


def full_attention(queries, keys, values,
                   query_omegas=None, query_thetas=None,
                   key_omegas=None, key_thetas=None, attn_mask=None,
                   *, mask_flag=True, scale=None, output_attention=False,
                   block_q=256, block_k=256):
    """Pallas TPU implementation of FullAttention.forward (eval mode).

    The omegas/thetas are accepted for signature parity with the PyTorch module
    but FullAttention ignores them.  block_q/block_k default to 256 to fill the
    v6e/v7x 256-wide MXU; 128 may be preferable on v5e (4x128x128 MXU).
    """
    # TODO(synk): only the default triangular causal mask is supported; an
    # explicit attn_mask tensor has no path here.
    assert attn_mask is None, "explicit attn_mask not supported"

    B, L, H, E = queries.shape
    _, S, _, D = values.shape
    if mask_flag:
        assert L == S, "TriangularCausalMask requires L == S"
    scale_val = float(scale) if scale is not None else 1.0 / math.sqrt(E)
    out_dtype = queries.dtype
    out_bytes = jnp.dtype(out_dtype).itemsize

    # Head-major layout + bf16 cast + softmax scale folded into q; the cast and
    # scale fuse into the single XLA transpose pass over each input (half the
    # HBM traffic into the kernel, no in-kernel (H,TQ,S)-sized scale multiply).
    q_t = (jnp.transpose(queries, (0, 2, 1, 3)) * scale_val).astype(MATMUL_DTYPE)
    k_t = jnp.transpose(keys, (0, 2, 1, 3)).astype(MATMUL_DTYPE)
    v_t = jnp.transpose(values, (0, 2, 1, 3)).astype(MATMUL_DTYPE)

    # Fixed 8-aligned tiles for any L/S: pad the sequence axes instead of
    # falling back to a full-length (VMEM-hostile) tile.
    tq = min(block_q, _round_up(L, 8))
    Lp = _round_up(L, tq)
    q_t = _pad_axis(q_t, 2, Lp)
    vmem_limit = _vmem_limit_bytes()

    if not output_attention:
        tk = min(block_k, _round_up(S, 8))
        Sp = _round_up(S, tk)
        k_p = _pad_axis(k_t, 2, Sp)
        v_p = _pad_axis(v_t, 2, Sp)
        grid = (B, Lp // tq, Sp // tk)

        kernel = partial(_flash_attention_kernel, causal=bool(mask_flag),
                         block_q=tq, block_k=tk, kv_len=S)
        cost = pl.CostEstimate(
            flops=2 * B * H * Lp * Sp * (E + D),
            transcendentals=B * H * Lp * Sp,
            bytes_accessed=2 * (q_t.size + k_p.size + v_p.size)
            + B * H * Lp * D * out_bytes)

        o_t = pl.pallas_call(
            kernel,
            out_shape=jax.ShapeDtypeStruct((B, H, Lp, D), out_dtype),
            grid_spec=pltpu.PrefetchScalarGridSpec(
                num_scalar_prefetch=0,
                grid=grid,
                in_specs=[
                    pl.BlockSpec((1, H, tq, E), lambda b, l, k: (b, 0, l, 0)),
                    pl.BlockSpec((1, H, tk, E), lambda b, l, k: (b, 0, k, 0)),
                    pl.BlockSpec((1, H, tk, D), lambda b, l, k: (b, 0, k, 0)),
                ],
                out_specs=pl.BlockSpec((1, H, tq, D), lambda b, l, k: (b, 0, l, 0)),
                scratch_shapes=[
                    pltpu.VMEM((H, tq, 1), jnp.float32),   # running max
                    pltpu.VMEM((H, tq, 1), jnp.float32),   # running denom
                    pltpu.VMEM((H, tq, D), jnp.float32),   # running output
                ],
            ),
            compiler_params=pltpu.CompilerParams(
                dimension_semantics=("parallel", "parallel", "arbitrary"),
                vmem_limit_bytes=vmem_limit),
            cost_estimate=cost,
        )(q_t, k_p, v_p)
        attn = None
    else:
        grid = (B, Lp // tq)
        kernel = partial(_full_attention_kernel, causal=bool(mask_flag),
                         block_q=tq)
        cost = pl.CostEstimate(
            flops=2 * B * H * Lp * S * (E + D),
            transcendentals=B * H * Lp * S,
            bytes_accessed=2 * (q_t.size + k_t.size + v_t.size)
            + B * H * Lp * (D + S) * out_bytes)

        o_t, attn_p = pl.pallas_call(
            kernel,
            out_shape=(jax.ShapeDtypeStruct((B, H, Lp, D), out_dtype),
                       jax.ShapeDtypeStruct((B, H, Lp, S), out_dtype)),
            grid_spec=pltpu.PrefetchScalarGridSpec(
                num_scalar_prefetch=0,
                grid=grid,
                in_specs=[
                    pl.BlockSpec((1, H, tq, E), lambda b, l: (b, 0, l, 0)),
                    # K/V index maps are constant in the L axis -> fetched once
                    # per batch.  TODO(synk): pipeline_mode=pl.Buffered(1) on
                    # these two specs would halve K/V VMEM residency (v7x).
                    pl.BlockSpec((1, H, S, E), lambda b, l: (b, 0, 0, 0)),
                    pl.BlockSpec((1, H, S, D), lambda b, l: (b, 0, 0, 0)),
                ],
                out_specs=(
                    pl.BlockSpec((1, H, tq, D), lambda b, l: (b, 0, l, 0)),
                    pl.BlockSpec((1, H, tq, S), lambda b, l: (b, 0, l, 0)),
                ),
            ),
            compiler_params=pltpu.CompilerParams(
                dimension_semantics=("parallel", "parallel"),
                vmem_limit_bytes=vmem_limit),
            cost_estimate=cost,
        )(q_t, k_t, v_t)
        attn = attn_p[:, :, :L, :]

    # TODO(synk): a lane-dense (B, L, H*D) kernel output (heads swapped into
    # lanes in-kernel) would remove this transpose and the D<128 masked stores;
    # kept out here for lowering robustness.
    V = jnp.transpose(o_t[:, :, :L, :], (0, 2, 1, 3))
    return V, attn


def _reference(queries, keys, values, mask_flag):
    B, L, H, E = queries.shape
    _, S, _, D = values.shape
    scale = 1.0 / math.sqrt(E)
    sc = jnp.einsum('blhe,bshe->bhls', queries, keys)
    if mask_flag:
        m = jnp.triu(jnp.ones((L, S), dtype=bool), k=1)
        sc = jnp.where(m[None, None], -jnp.inf, sc)
    A = jax.nn.softmax(scale * sc, axis=-1)
    V = jnp.einsum('bhls,bshd->blhd', A, values)
    return V, A


if __name__ == "__main__":
    master = jax.random.PRNGKey(0)

    def run_case(B, L, S, H, E, D, mask_flag, output_attention, key):
        ks = jax.random.split(key, 7)
        M = 2
        q = jax.random.normal(ks[0], (B, L, H, E), jnp.float32)
        k = jax.random.normal(ks[1], (B, S, H, E), jnp.float32)
        v = jax.random.normal(ks[2], (B, S, H, D), jnp.float32)
        # Present in the PyTorch signature; unused by FullAttention.forward.
        qo = jax.random.normal(ks[3], (B, L, H, M), jnp.float32)
        qt = jax.random.normal(ks[4], (B, L, H, M), jnp.float32)
        ko = jax.random.normal(ks[5], (B, S, H, M), jnp.float32)
        kt = jax.random.normal(ks[6], (B, S, H, M), jnp.float32)

        V, A = full_attention(q, k, v, qo, qt, ko, kt, attn_mask=None,
                              mask_flag=mask_flag, scale=None,
                              output_attention=output_attention)
        jax.block_until_ready(V)

        V_ref, A_ref = _reference(q, k, v, mask_flag)
        assert V.shape == (B, L, H, D)
        assert bool(jnp.all(jnp.isfinite(V)))
        assert bool(jnp.allclose(V, V_ref, atol=7.5e-2, rtol=5e-2)), "V mismatch"
        if output_attention:
            assert A.shape == (B, H, L, S)
            assert bool(jnp.all(jnp.isfinite(A)))
            assert bool(jnp.allclose(jnp.sum(A, axis=-1), 1.0, atol=1e-2))
            assert bool(jnp.allclose(A, A_ref, atol=3e-2)), "A mismatch"
        else:
            assert A is None

    k0, k1, k2, k3 = jax.random.split(master, 4)
    # causal, attention matrix returned (whole-S path)
    run_case(2, 8, 8, 4, 32, 32, mask_flag=True, output_attention=True, key=k0)
    # causal, flash path (online softmax over KV tiles)
    run_case(2, 8, 8, 4, 32, 32, mask_flag=True, output_attention=False, key=k1)
    # causal, L/S not multiples of 8 -> exercises padding + key-padding mask
    run_case(2, 12, 12, 4, 32, 32, mask_flag=True, output_attention=False, key=k2)
    # non-causal cross attention, L != S
    run_case(2, 8, 16, 4, 32, 32, mask_flag=False, output_attention=False, key=k3)

    print("KERNEL_OK")
</pallas_src>

<mosaic_0001>
module attributes {stable_mosaic.version = 11 : i64} {
  func.func @_full_attention_kernel(%arg0: i32, %arg1: i32, %arg2: memref<1x4x8x32xbf16, #tpu.memory_space<vmem>>, %arg3: memref<1x4x8x32xbf16, #tpu.memory_space<vmem>>, %arg4: memref<1x4x8x32xbf16, #tpu.memory_space<vmem>>, %arg5: memref<1x4x8x32xf32, #tpu.memory_space<vmem>>, %arg6: memref<1x4x8x8xf32, #tpu.memory_space<vmem>>) attributes {dimension_semantics = [#tpu.dimension_semantics<parallel>, #tpu.dimension_semantics<parallel>], iteration_bounds = array<i64: 2, 1>, scalar_prefetch = 0 : i64, scratch_operands = 0 : i64, tpu.core_type = #tpu.core_type<tc>, window_params = [{transform_indices = @transform_0, window_bounds = array<i64: 1, 4, 8, 32>}, {transform_indices = @transform_1, window_bounds = array<i64: 1, 4, 8, 32>}, {transform_indices = @transform_2, window_bounds = array<i64: 1, 4, 8, 32>}, {transform_indices = @transform_3, window_bounds = array<i64: 1, 4, 8, 32>}, {transform_indices = @transform_4, window_bounds = array<i64: 1, 4, 8, 8>}]} {
    %c0 = arith.constant 0 : index
    %c0_0 = arith.constant 0 : index
    %c0_1 = arith.constant 0 : index
    %c0_2 = arith.constant 0 : index
    %0 = vector.load %arg2[%c0, %c0_0, %c0_1, %c0_2] : memref<1x4x8x32xbf16, #tpu.memory_space<vmem>>, vector<1x4x8x32xbf16>
    %1 = vector.shape_cast %0 : vector<1x4x8x32xbf16> to vector<4x8x32xbf16>
    %c0_3 = arith.constant 0 : index
    %c0_4 = arith.constant 0 : index
    %c0_5 = arith.constant 0 : index
    %c0_6 = arith.constant 0 : index
    %2 = vector.load %arg3[%c0_3, %c0_4, %c0_5, %c0_6] : memref<1x4x8x32xbf16, #tpu.memory_space<vmem>>, vector<1x4x8x32xbf16>
    %3 = vector.shape_cast %2 : vector<1x4x8x32xbf16> to vector<4x8x32xbf16>
    %c0_7 = arith.constant 0 : index
    %c0_8 = arith.constant 0 : index
    %c0_9 = arith.constant 0 : index
    %c0_10 = arith.constant 0 : index
    %4 = vector.load %arg4[%c0_7, %c0_8, %c0_9, %c0_10] : memref<1x4x8x32xbf16, #tpu.memory_space<vmem>>, vector<1x4x8x32xbf16>
    %5 = vector.shape_cast %4 : vector<1x4x8x32xbf16> to vector<4x8x32xbf16>
    "tpu.trace_start"() <{level = 10 : i32, message = "hqe,hke->hqk"}> : () -> ()
    %cst = arith.constant dense<0.000000e+00> : vector<4x8x8xf32>
    %6 = tpu.matmul %1, %3, %cst {dimension_numbers = #tpu.dot_dimension_numbers<[2], [2], [1], [1], [0, 0, 0, 1, 1, 1], [0], [0]>} : vector<4x8x32xbf16>, vector<4x8x32xbf16>, vector<4x8x8xf32> -> vector<4x8x8xf32>
    "tpu.trace_stop"() : () -> ()
    %c8_i32 = arith.constant 8 : i32
    %7 = arith.muli %arg1, %c8_i32 : i32
    %8 = tpu.iota {dimensions = array<i32: 0>} : vector<8x8xi32>
    %9 = vector.broadcast %7 : i32 to vector<8x8xi32>
    %10 = arith.addi %9, %8 : vector<8x8xi32>
    %11 = tpu.iota {dimensions = array<i32: 1>} : vector<8x8xi32>
    %12 = arith.cmpi sle, %11, %10 : vector<8x8xi32>
    %13 = vector.shape_cast %12 : vector<8x8xi1> to vector<1x8x8xi1>
    %cst_11 = arith.constant -2.38197633E+38 : f32
    %14 = vector.shape_cast %13 : vector<1x8x8xi1> to vector<1x8x8xi1>
    %15 = vector.broadcast %14 : vector<1x8x8xi1> to vector<4x8x8xi1>
    %16 = vector.broadcast %cst_11 : f32 to vector<4x8x8xf32>
    %17 = arith.select %15, %6, %16 : vector<4x8x8xi1>, vector<4x8x8xf32>
    %cst_12 = arith.constant dense<0xFF800000> : vector<4x8xf32>
    %18 = vector.multi_reduction <maximumf>, %17, %cst_12 [2] : vector<4x8x8xf32> to vector<4x8xf32>
    %19 = vector.shape_cast %18 : vector<4x8xf32> to vector<4x8x1xf32>
    %20 = vector.broadcast %19 : vector<4x8x1xf32> to vector<4x8x8xf32>
    %21 = arith.subf %17, %20 : vector<4x8x8xf32>
    %22 = math.exp %21 : vector<4x8x8xf32>
    %cst_13 = arith.constant dense<0.000000e+00> : vector<4x8xf32>
    %23 = vector.multi_reduction <add>, %22, %cst_13 [2] : vector<4x8x8xf32> to vector<4x8xf32>
    %24 = vector.shape_cast %23 : vector<4x8xf32> to vector<4x8x1xf32>
    %25 = tpu.reciprocal %24 {approx = true} : vector<4x8x1xf32> -> vector<4x8x1xf32>
    %26 = vector.broadcast %25 : vector<4x8x1xf32> to vector<4x8x8xf32>
    %27 = arith.mulf %22, %26 : vector<4x8x8xf32>
    %28 = arith.truncf %27 : vector<4x8x8xf32> to vector<4x8x8xbf16>
    "tpu.trace_start"() <{level = 10 : i32, message = "hqk,hkd->hqd"}> : () -> ()
    %cst_14 = arith.constant dense<0.000000e+00> : vector<4x8x32xf32>
    %29 = tpu.matmul %28, %5, %cst_14 {dimension_numbers = #tpu.dot_dimension_numbers<[2], [1], [1], [2], [0, 0, 0, 1, 1, 2], [0], [0]>} : vector<4x8x8xbf16>, vector<4x8x32xbf16>, vector<4x8x32xf32> -> vector<4x8x32xf32>
    "tpu.trace_stop"() : () -> ()
    %c0_15 = arith.constant 0 : index
    %c0_16 = arith.constant 0 : index
    %c0_17 = arith.constant 0 : index
    %c0_18 = arith.constant 0 : index
    %30 = vector.load %arg5[%c0_15, %c0_16, %c0_17, %c0_18] : memref<1x4x8x32xf32, #tpu.memory_space<vmem>>, vector<1x4x8x32xf32>
    %31 = vector.shape_cast %30 : vector<1x4x8x32xf32> to vector<4x8x32xf32>
    %32 = vector.shape_cast %29 : vector<4x8x32xf32> to vector<1x4x8x32xf32>
    tpu.vector_store %arg5[%c0_15, %c0_16, %c0_17, %c0_18], %32 {strides = array<i32>} : memref<1x4x8x32xf32, #tpu.memory_space<vmem>>, vector<1x4x8x32xf32>,
    %c0_19 = arith.constant 0 : index
    %c0_20 = arith.constant 0 : index
    %c0_21 = arith.constant 0 : index
    %c0_22 = arith.constant 0 : index
    %33 = vector.load %arg6[%c0_19, %c0_20, %c0_21, %c0_22] : memref<1x4x8x8xf32, #tpu.memory_space<vmem>>, vector<1x4x8x8xf32>
    %34 = vector.shape_cast %33 : vector<1x4x8x8xf32> to vector<4x8x8xf32>
    %35 = vector.shape_cast %27 : vector<4x8x8xf32> to vector<1x4x8x8xf32>
    tpu.vector_store %arg6[%c0_19, %c0_20, %c0_21, %c0_22], %35 {strides = array<i32>} : memref<1x4x8x8xf32, #tpu.memory_space<vmem>>, vector<1x4x8x8xf32>,
    return
  }
  func.func @transform_0(%arg0: i32, %arg1: i32) -> (i32, i32, i32, i32) {
    %c0_i32 = arith.constant 0 : i32
    %c0_i32_0 = arith.constant 0 : i32
    %c0_i32_1 = arith.constant 0 : i32
    return %arg0, %c0_i32, %arg1, %c0_i32_0 : i32, i32, i32, i32
  }
  func.func @transform_1(%arg0: i32, %arg1: i32) -> (i32, i32, i32, i32) {
    %c0_i32 = arith.constant 0 : i32
    %c0_i32_0 = arith.constant 0 : i32
    %c0_i32_1 = arith.constant 0 : i32
    %c0_i32_2 = arith.constant 0 : i32
    return %arg0, %c0_i32, %c0_i32_0, %c0_i32_1 : i32, i32, i32, i32
  }
  func.func @transform_2(%arg0: i32, %arg1: i32) -> (i32, i32, i32, i32) {
    %c0_i32 = arith.constant 0 : i32
    %c0_i32_0 = arith.constant 0 : i32
    %c0_i32_1 = arith.constant 0 : i32
    %c0_i32_2 = arith.constant 0 : i32
    return %arg0, %c0_i32, %c0_i32_0, %c0_i32_1 : i32, i32, i32, i32
  }
  func.func @transform_3(%arg0: i32, %arg1: i32) -> (i32, i32, i32, i32) {
    %c0_i32 = arith.constant 0 : i32
    %c0_i32_0 = arith.constant 0 : i32
    %c0_i32_1 = arith.constant 0 : i32
    return %arg0, %c0_i32, %arg1, %c0_i32_0 : i32, i32, i32, i32
  }
  func.func @transform_4(%arg0: i32, %arg1: i32) -> (i32, i32, i32, i32) {
    %c0_i32 = arith.constant 0 : i32
    %c0_i32_0 = arith.constant 0 : i32
    %c0_i32_1 = arith.constant 0 : i32
    return %arg0, %c0_i32, %arg1, %c0_i32_0 : i32, i32, i32, i32
  }
}

</mosaic_0001>

<llo_original>
// kernel: tpu_custom_call.1
$region0: #{tpu_custom_call.1}
  #allocation0 [shape = 'u32[]', space=smem, size = 0x4, offset = 0x4, fixed_abs, tag = 'smem constant byte address 0x4 - core index']
  #allocation1 [shape = 'u32[144,128]{1,0:T(1,128)}', space=vmem, size = 0x12000, scoped, tag = 'internal scratch']
  %s0 = inlined_call_operand.hbm [shape: bf16[2,4,8,32], index: 0, kind: input, shape index: {}]
  %s1 = inlined_call_operand.hbm [shape: bf16[2,4,8,32], index: 1, kind: input, shape index: {}]
  %s2 = inlined_call_operand.hbm [shape: bf16[2,4,8,32], index: 2, kind: input, shape index: {}]
  %s3 = inlined_call_operand.hbm [shape: f32[2,4,8,32], index: 3, kind: output, shape index: {0}]
  %s4 = inlined_call_operand.hbm [shape: f32[2,4,8,8], index: 4, kind: output, shape index: {1}]
  %5 = xla_tuple %s3, %s4
  %s6 = sld [smem:[#allocation0]]
  $region65: #{tpu_custom_call.1} parent=0
    _
  %s8 = ssub.s32 1, %s6
  %s9 = scalar_select 0, %s8, %s6
  $region1: #{tpu_custom_call.1} parent=0
    #allocation2 [shape = 'u8[16384]{0}', space=vmem, size = 0x4000, scoped, tag = 'input window, operand 0']
    #allocation3 [shape = 's32[2]{0}', space=sflag, size = 0x8, scoped, tag = 'scoped memory for tpu_custom_call.1']
    #allocation4 [shape = 's32[2]{0}', space=sflag, size = 0x8, scoped, tag = 'scoped memory for tpu_custom_call.1']
    #allocation5 [shape = 'u8[16384]{0}', space=vmem, size = 0x4000, scoped, tag = 'input window, operand 1']
    #allocation6 [shape = 's32[2]{0}', space=sflag, size = 0x8, scoped, tag = 'scoped memory for tpu_custom_call.1']
    #allocation7 [shape = 'u8[16384]{0}', space=vmem, size = 0x4000, scoped, tag = 'input window, operand 2']
    #allocation8 [shape = 'u8[32768]{0}', space=vmem, size = 0x8000, scoped, tag = 'output window, operand 0']
    #allocation9 [shape = 'u8[32768]{0}', space=vmem, size = 0x8000, scoped, tag = 'output window, operand 1']
    #allocation10 [shape = 's32[2]{0}', space=sflag, size = 0x8, scoped, tag = 'scoped memory for tpu_custom_call.1']
    %10 = vsyncpa [#allocation3], 0
    %s11 = scalar_lea.sflag [#allocation3], 1
    %12 = vsyncpa %s11, 0
    %13 = vsyncpa [#allocation6], 0
    %s14 = scalar_lea.sflag [#allocation6], 1
    %15 = vsyncpa %s14, 0
    %16 = vsyncpa [#allocation4], 0
    %s17 = scalar_lea.sflag [#allocation4], 1
    %18 = vsyncpa %s17, 0
    %19 = vsyncpa [#allocation10], 0
    %s20 = scalar_lea.sflag [#allocation10], 1
    %21 = vsyncpa %s20, 0
    loop: start=0, step=1, limit=4
    $region2: #{tpu_custom_call.1} parent=1 // loop_pre_header
      _
    $region3: #{tpu_custom_call.1} parent=1 // loop_header
      %s23 = sphi 0, %s27
      %p24 = scmp.ge.s32.totalorder %s23, 4
      %s30 = sphi 0, %s42
      %s31 = sphi 0, %s38
      %s32 = sphi 0, %s30
      %s33 = sphi 0, %s31
      %s34 = sphi 0, %s32
      %s35 = sphi 0, %s33
      %s47 = sphi 0, %s49
      %s50 = sphi 0, %s47
      %s51 = sphi 0, %s50
      %s67 = sphi 0, %s51
      %s73 = sphi 0, %s75
      %s76 = sphi 0, %s73
      %s77 = sphi 0, %s76
      %s93 = sphi 0, %s77
      %s99 = sphi 0, %s101
      %s102 = sphi 0, %s99
      %s103 = sphi 0, %s102
      %s119 = sphi 0, %s103
      %s127 = sphi 0, %s129
      %s130 = sphi 0, %s127
      %s131 = sphi 0, %s130
      %s147 = sphi 0, %s131
      %s155 = sphi 0, %s157
      %s158 = sphi 0, %s155
      %s159 = sphi 0, %s158
      %s175 = sphi 0, %s159
    $region4: #{tpu_custom_call.1} parent=1 // loop_header_branch
      %26 = sbr.rel (%p24) target = $region8
    $region5: #{tpu_custom_call.1} parent=1 // loop_body
      %s28 = ssub.s32 %s23, 1
      %s29 = ssub.s32 %s23, 2
      %s36 = sadd.s32 1, %s31
      %p37 = scmp.ge.s32.totalorder %s36, 1
      %s38 = scalar_select %p37, 0, %s36
      %s39 = sadd.s32 1, %s30
      %s40 = scalar_select %p37, %s39, %s30
      %p41 = scmp.ge.s32.totalorder %s40, 2
      %s42 = scalar_select %p41, 0, %s40
      %s43 = ssub.s32 %s30, %s42
      %s44 = ssub.s32 %s31, %s38
      %s45 = sor.u32 %s43, %s44
      %p46 = scmp.eq.s32.totalorder %s45, 0
      %s48 = sadd.s32 %s47, 1
      %s49 = scalar_select %p46, %s47, %s48
      %p52 = pneg %p46
      %p53 = scmp.eq.s32.totalorder %s23, 1
      %p54 = por %p52, %p53
      %p55 = scmp.ne.s32.totalorder %s47, %s50
      %p56 = scmp.eq.s32.totalorder %s23, 0
      %p57 = por %p55, %p56
      %p58 = scmp.ne.s32.totalorder %s47, %s50
      %p59 = scmp.eq.s32.totalorder %s28, 1
      %p60 = por %p58, %p59
      %p61 = scmp.ne.s32.totalorder %s50, %s51
      %p62 = scmp.eq.s32.totalorder %s28, 0
      %p63 = por %p61, %p62
      %p64 = scmp.ne.s32.totalorder %s50, %s51
      %p65 = scmp.eq.s32.totalorder %s29, 1
      %p66 = por %p64, %p65
      %p68 = scmp.ne.s32.totalorder %s51, %s67
      %p69 = scmp.eq.s32.totalorder %s29, 0
      %p70 = por %p68, %p69
      %s71 = ssub.s32 %s30, %s42
      %p72 = scmp.eq.s32.totalorder %s71, 0
      %s74 = sadd.s32 %s73, 1
      %s75 = scalar_select %p72, %s73, %s74
      %p78 = pneg %p72
      %p79 = scmp.eq.s32.totalorder %s23, 1
      %p80 = por %p78, %p79
      %p81 = scmp.ne.s32.totalorder %s73, %s76
      %p82 = scmp.eq.s32.totalorder %s23, 0
      %p83 = por %p81, %p82
      %p84 = scmp.ne.s32.totalorder %s73, %s76
      %p85 = scmp.eq.s32.totalorder %s28, 1
      %p86 = por %p84, %p85
      %p87 = scmp.ne.s32.totalorder %s76, %s77
      %p88 = scmp.eq.s32.totalorder %s28, 0
      %p89 = por %p87, %p88
      %p90 = scmp.ne.s32.totalorder %s76, %s77
      %p91 = scmp.eq.s32.totalorder %s29, 1
      %p92 = por %p90, %p91
      %p94 = scmp.ne.s32.totalorder %s77, %s93
      %p95 = scmp.eq.s32.totalorder %s29, 0
      %p96 = por %p94, %p95
      %s97 = ssub.s32 %s30, %s42
      %p98 = scmp.eq.s32.totalorder %s97, 0
      %s100 = sadd.s32 %s99, 1
      %s101 = scalar_select %p98, %s99, %s100
      %p104 = pneg %p98
      %p105 = scmp.eq.s32.totalorder %s23, 1
      %p106 = por %p104, %p105
      %p107 = scmp.ne.s32.totalorder %s99, %s102
      %p108 = scmp.eq.s32.totalorder %s23, 0
      %p109 = por %p107, %p108
      %p110 = scmp.ne.s32.totalorder %s99, %s102
      %p111 = scmp.eq.s32.totalorder %s28, 1
      %p112 = por %p110, %p111
      %p113 = scmp.ne.s32.totalorder %s102, %s103
      %p114 = scmp.eq.s32.totalorder %s28, 0
      %p115 = por %p113, %p114
      %p116 = scmp.ne.s32.totalorder %s102, %s103
      %p117 = scmp.eq.s32.totalorder %s29, 1
      %p118 = por %p116, %p117
      %p120 = scmp.ne.s32.totalorder %s103, %s119
      %p121 = scmp.eq.s32.totalorder %s29, 0
      %p122 = por %p120, %p121
      %s123 = ssub.s32 %s30, %s42
      %s124 = ssub.s32 %s31, %s38
      %s125 = sor.u32 %s123, %s124
      %p126 = scmp.eq.s32.totalorder %s125, 0
      %s128 = sadd.s32 %s127, 1
      %s129 = scalar_select %p126, %s127, %s128
      %p132 = pneg %p126
      %p133 = scmp.eq.s32.totalorder %s23, 1
      %p134 = por %p132, %p133
      %p135 = scmp.ne.s32.totalorder %s127, %s130
      %p136 = scmp.eq.s32.totalorder %s23, 0
      %p137 = por %p135, %p136
      %p138 = scmp.ne.s32.totalorder %s127, %s130
      %p139 = scmp.eq.s32.totalorder %s28, 1
      %p140 = por %p138, %p139
      %p141 = scmp.ne.s32.totalorder %s130, %s131
      %p142 = scmp.eq.s32.totalorder %s28, 0
      %p143 = por %p141, %p142
      %p144 = scmp.ne.s32.totalorder %s130, %s131
      %p145 = scmp.eq.s32.totalorder %s29, 1
      %p146 = por %p144, %p145
      %p148 = scmp.ne.s32.totalorder %s131, %s147
      %p149 = scmp.eq.s32.totalorder %s29, 0
      %p150 = por %p148, %p149
      %s151 = ssub.s32 %s30, %s42
      %s152 = ssub.s32 %s31, %s38
      %s153 = sor.u32 %s151, %s152
      %p154 = scmp.eq.s32.totalorder %s153, 0
      %s156 = sadd.s32 %s155, 1
      %s157 = scalar_select %p154, %s155, %s156
      %p160 = pneg %p154
      %p161 = scmp.eq.s32.totalorder %s23, 1
      %p162 = por %p160, %p161
      %p163 = scmp.ne.s32.totalorder %s155, %s158
      %p164 = scmp.eq.s32.totalorder %s23, 0
      %p165 = por %p163, %p164
      %p166 = scmp.ne.s32.totalorder %s155, %s158
      %p167 = scmp.eq.s32.totalorder %s28, 1
      %p168 = por %p166, %p167
      %p169 = scmp.ne.s32.totalorder %s158, %s159
      %p170 = scmp.eq.s32.totalorder %s28, 0
      %p171 = por %p169, %p170
      %p172 = scmp.ne.s32.totalorder %s158, %s159
      %p173 = scmp.eq.s32.totalorder %s29, 1
      %p174 = por %p172, %p173
      %p176 = scmp.ne.s32.totalorder %s159, %s175
      %p177 = scmp.eq.s32.totalorder %s29, 0
      %p178 = por %p176, %p177
      %p179 = scmp.le.s32.totalorder 1, %s23
      %p180 = scmp.lt.s32.totalorder %s23, 3
      %p181 = pnand %p179, %p180
      %p182 = pneg %p181
      // Predicated region
      $region9: #{tpu_custom_call.1} parent=5 // pred_check
        _
      $region10: #{tpu_custom_call.1} parent=5 // pred_check_branch
        %184 = sbr.rel (%p181) target = $region12
      $region11: #{tpu_custom_call.1} parent=5 // pred_region
        %s185 = ssub.s32 %s23, 1
      $region12: #{tpu_custom_call.1} parent=5 // pred_fallthru
        _
      %p186 = scmp.lt.s32.totalorder %s23, 2
      // Predicated region
      $region13: #{tpu_custom_call.1} parent=5 // pred_check
        %p187 = pneg %p186
      $region14: #{tpu_custom_call.1} parent=5 // pred_check_branch
        %189 = sbr.rel (%p187) target = $region16
      $region15: #{tpu_custom_call.1} parent=5 // pred_region
        // Predicated region
        $region17: #{tpu_custom_call.1} parent=15 // pred_check
          %p190 = pneg %p57
        $region18: #{tpu_custom_call.1} parent=15 // pred_check_branch
          %192 = sbr.rel (%p190) target = $region20
        $region19: #{tpu_custom_call.1} parent=15 // pred_region
          %s193 = sand.u32 %s47, 1
          %s194 = scalar_lea.sflag [#allocation3], %s193
          %s195 = sand.u32 %s47, 1
          %s196 = smul.addr %s195, 16
          %s197 = scalar_lea.vmem [#allocation2], %s196
          %s199 = ssub.s32 256, 256
          %200 = vsyncadd %s194, %s199
          %s201 = smul.addr %s30, 4
          %s202 = sadd.s32 %s31, %s201
          %s203 = smul.addr %s202, 64
          %s204 = scalar_lea.hbm %s0, %s203
          %s205 = sshll.u32 %s197, 4
          %s206 = int_to_ptr.vmem [resolvable:$true] %s205
          %211 = dma.hbm_to_vmem [thread:$0]  %s204, 256, %s206, %s194, 64, 64, 4
        $region20: #{tpu_custom_call.1} parent=15 // pred_fallthru
          _
        // Predicated region
        $region21: #{tpu_custom_call.1} parent=15 // pred_check
          %p212 = pneg %p83
        $region22: #{tpu_custom_call.1} parent=15 // pred_check_branch
          %214 = sbr.rel (%p212) target = $region24
        $region23: #{tpu_custom_call.1} parent=15 // pred_region
          %s215 = sand.u32 %s23, 1
          %s216 = scalar_lea.sflag [#allocation6], %s215
          %s217 = sand.u32 %s73, 1
          %s218 = smul.addr %s217, 16
          %s219 = scalar_lea.vmem [#allocation5], %s218
          %s221 = ssub.s32 256, 256
          %222 = vsyncadd %s216, %s221
          %s223 = smul.addr %s30, 4
          %s224 = smul.addr %s223, 64
          %s225 = scalar_lea.hbm %s1, %s224
          %s226 = sshll.u32 %s219, 4
          %s227 = int_to_ptr.vmem [resolvable:$true] %s226
          %232 = dma.hbm_to_vmem [thread:$0]  %s225, 256, %s227, %s216, 64, 64, 4
        $region24: #{tpu_custom_call.1} parent=15 // pred_fallthru
          _
        // Predicated region
        $region25: #{tpu_custom_call.1} parent=15 // pred_check
          %p233 = pneg %p109
        $region26: #{tpu_custom_call.1} parent=15 // pred_check_branch
          %235 = sbr.rel (%p233) target = $region28
        $region27: #{tpu_custom_call.1} parent=15 // pred_region
          %s236 = sand.u32 %s23, 1
          %s237 = scalar_lea.sflag [#allocation6], %s236
          %s238 = sand.u32 %s99, 1
          %s239 = smul.addr %s238, 16
          %s240 = scalar_lea.vmem [#allocation7], %s239
          %s242 = ssub.s32 256, 256
          %243 = vsyncadd %s237, %s242
          %s244 = smul.addr %s30, 4
          %s245 = smul.addr %s244, 64
          %s246 = scalar_lea.hbm %s2, %s245
          %s247 = sshll.u32 %s240, 4
          %s248 = int_to_ptr.vmem [resolvable:$true] %s247
          %253 = dma.hbm_to_vmem [thread:$0]  %s246, 256, %s248, %s237, 64, 64, 4
        $region28: #{tpu_custom_call.1} parent=15 // pred_fallthru
          _
      $region16: #{tpu_custom_call.1} parent=5 // pred_fallthru
        _
      %p254 = scmp.le.s32.totalorder 1, %s23
      %p255 = scmp.lt.s32.totalorder %s23, 3
      %p256 = pnand %p254, %p255
      %p257 = pneg %p256
      // Predicated region
      $region29: #{tpu_custom_call.1} parent=5 // pred_check
        _
      $region30: #{tpu_custom_call.1} parent=5 // pred_check_branch
        %259 = sbr.rel (%p256) target = $region32
      $region31: #{tpu_custom_call.1} parent=5 // pred_region
        %s260 = ssub.s32 %s23, 1
        %s261 = sand.u32 %s50, 1
        %s262 = scalar_lea.sflag [#allocation3], %s261
        %s263 = sand.u32 %s50, 1
        %s264 = smul.addr %s263, 16
        %s265 = scalar_lea.vmem [#allocation2], %s264
        // Predicated region
        $region33: #{tpu_custom_call.1} parent=31 // pred_check
          %p266 = pneg %p63
        $region34: #{tpu_custom_call.1} parent=31 // pred_check_branch
          %268 = sbr.rel (%p266) target = $region36
        $region35: #{tpu_custom_call.1} parent=31 // pred_region
          %269 = dma.done %s262, 256
        $region36: #{tpu_custom_call.1} parent=31 // pred_fallthru
          _
        %s270 = sand.u32 %s28, 1
        %s271 = scalar_lea.sflag [#allocation6], %s270
        %s272 = sand.u32 %s76, 1
        %s273 = smul.addr %s272, 16
        %s274 = scalar_lea.vmem [#allocation5], %s273
        // Predicated region
        $region37: #{tpu_custom_call.1} parent=31 // pred_check
          %p275 = pneg %p89
        $region38: #{tpu_custom_call.1} parent=31 // pred_check_branch
          %277 = sbr.rel (%p275) target = $region40
        $region39: #{tpu_custom_call.1} parent=31 // pred_region
          %278 = dma.done %s271, 256
        $region40: #{tpu_custom_call.1} parent=31 // pred_fallthru
          _
        %s279 = sand.u32 %s28, 1
        %s280 = scalar_lea.sflag [#allocation6], %s279
        %s281 = sand.u32 %s102, 1
        %s282 = smul.addr %s281, 16
        %s283 = scalar_lea.vmem [#allocation7], %s282
        // Predicated region
        $region41: #{tpu_custom_call.1} parent=31 // pred_check
          %p284 = pneg %p115
        $region42: #{tpu_custom_call.1} parent=31 // pred_check_branch
          %286 = sbr.rel (%p284) target = $region44
        $region43: #{tpu_custom_call.1} parent=31 // pred_region
          %287 = dma.done %s280, 256
        $region44: #{tpu_custom_call.1} parent=31 // pred_fallthru
          _
        %s288 = sand.u32 %s50, 1
        %s289 = scalar_lea.sflag [#allocation3], %s288
        %s290 = sand.u32 %s50, 1
        %s291 = smul.addr %s290, 16
        %s292 = scalar_lea.vmem [#allocation2], %s291
        %p293 = pneg %p63
        %p294 = pneg %p60
        %s295 = sand.u32 %s28, 1
        %s296 = scalar_lea.sflag [#allocation6], %s295
        %s297 = sand.u32 %s76, 1
        %s298 = smul.addr %s297, 16
        %s299 = scalar_lea.vmem [#allocation5], %s298
        %p300 = pneg %p89
        %p301 = pneg %p86
        %s302 = sand.u32 %s28, 1
        %s303 = scalar_lea.sflag [#allocation6], %s302
        %s304 = sand.u32 %s102, 1
        %s305 = smul.addr %s304, 16
        %s306 = scalar_lea.vmem [#allocation7], %s305
        %p307 = pneg %p115
        %p308 = pneg %p112
        %p309 = pneg %p143
        %p310 = pneg %p140
        %s311 = sand.u32 %s130, 1
        %s312 = scalar_lea.sflag [#allocation4], %s311
        %s313 = sand.u32 %s130, 1
        %s314 = smul.addr %s313, 32
        %s315 = scalar_lea.vmem [#allocation8], %s314
        %p316 = pneg %p171
        %p317 = pneg %p168
        %s318 = sand.u32 %s158, 1
        %s319 = scalar_lea.sflag [#allocation10], %s318
        %s320 = sand.u32 %s158, 1
        %s321 = smul.addr %s320, 32
        %s322 = scalar_lea.vmem [#allocation9], %s321
        %v324 = vld [vmem:[%s265] sm:$0xf]
        %v325 = vld [vmem:[%s265 + $0x4] sm:$0xf]
        %v326 = vld [vmem:[%s265 + $0x8] sm:$0xf]
        %v327 = vld [vmem:[%s265 + $0xc] sm:$0xf]
        %v328 = vld [vmem:[%s274] sm:$0xf]
        %v329 = vld [vmem:[%s274 + $0x4] sm:$0xf]
        %v330 = vld [vmem:[%s274 + $0x8] sm:$0xf]
        %v331 = vld [vmem:[%s274 + $0xc] sm:$0xf]
        %v332 = vld [vmem:[%s283] sm:$0xf]
        %v333 = vld [vmem:[%s283 + $0x4] sm:$0xf]
        %v334 = vld [vmem:[%s283 + $0x8] sm:$0xf]
        %v335 = vld [vmem:[%s283 + $0xc] sm:$0xf]
        %vm336 = vcmask 261120
        %v338 = vsel %vm336, %v324, 0
        %v341 = vsel %vm336, %v328, 0
        %343 = vmatprep.subr.bf16.mxu0 0
        %344 = vmatpush1.bf16.xpose.msra.mxu0 0
        %345 = vmatprep.subr.bf16.mxu0 0
        %346 = vmatpush1.bf16.xpose.msra.mxu0 0
        %347 = vmatprep.subr.bf16.mxu0 0
        %348 = vmatpush1.bf16.xpose.msra.mxu0 0
        %349 = vmatprep.subr.bf16.mxu0 0
        %350 = vmatpush1.bf16.xpose.msra.mxu0 0
        %351 = vmatprep.subr.bf16.mxu0 0
        %352 = vmatpush1.bf16.xpose.msra.mxu0 0
        %353 = vmatprep.subr.bf16.mxu0 0
        %354 = vmatpush1.bf16.xpose.msra.mxu0 0
        %355 = vmatprep.subr.bf16.mxu0 0
        %356 = vmatpush1.bf16.xpose.msra.mxu0 0
        %357 = vmatprep.subr.bf16.mxu0 0
        %358 = vmatpush1.bf16.xpose.msra.mxu0 %v341
        %359 = vmatprep.subr.bf16.mxu0 0
        %360 = vmatpush2.bf16.xpose.msra.mxu0 0
        %361 = vmatprep.subr.bf16.mxu0 0
        %362 = vmatpush2.bf16.xpose.msra.mxu0 0
        %363 = vmatprep.subr.bf16.mxu0 0
        %364 = vmatpush2.bf16.xpose.msra.mxu0 0
        %365 = vmatprep.subr.bf16.mxu0 0
        %366 = vmatpush2.bf16.xpose.msra.mxu0 0
        %367 = vmatprep.subr.bf16.mxu0 0
        %368 = vmatpush2.bf16.xpose.msra.mxu0 0
        %369 = vmatprep.subr.bf16.mxu0 0
        %370 = vmatpush2.bf16.xpose.msra.mxu0 0
        %371 = vmatprep.subr.bf16.mxu0 0
        %372 = vmatpush2.bf16.xpose.msra.mxu0 0
        %373 = vmatprep.subr.bf16.mxu0 0
        %374 = vmatpush2.bf16.xpose.msra.mxu0 0
        %375 = vmatprep.mubr.bf16.mxu0 0
        %376 = vmatmul.mubr.bf16.gmra.mxu0 %v338
        %v377 = vpop.f32.mrf.mxu0
        %v378 = vadd.f32 0.0, %v377
        %v379 = vpop.f32.mrf.mxu0
        %v380 = vpop.f32.mrf.mxu0
        %v381 = vpop.f32.mrf.mxu0
        %382 = vdwg.mxu0
        %v384 = vsel %vm336, %v325, 0
        %v387 = vsel %vm336, %v329, 0
        %389 = vmatprep.subr.bf16.mxu0 0
        %390 = vmatpush1.bf16.xpose.msra.mxu0 0
        %391 = vmatprep.subr.bf16.mxu0 0
        %392 = vmatpush1.bf16.xpose.msra.mxu0 0
        %393 = vmatprep.subr.bf16.mxu0 0
        %394 = vmatpush1.bf16.xpose.msra.mxu0 0
        %395 = vmatprep.subr.bf16.mxu0 0
        %396 = vmatpush1.bf16.xpose.msra.mxu0 0
        %397 = vmatprep.subr.bf16.mxu0 0
        %398 = vmatpush1.bf16.xpose.msra.mxu0 0
        %399 = vmatprep.subr.bf16.mxu0 0
        %400 = vmatpush1.bf16.xpose.msra.mxu0 0
        %401 = vmatprep.subr.bf16.mxu0 0
        %402 = vmatpush1.bf16.xpose.msra.mxu0 0
        %403 = vmatprep.subr.bf16.mxu0 0
        %404 = vmatpush1.bf16.xpose.msra.mxu0 %v387
        %405 = vmatprep.subr.bf16.mxu0 0
        %406 = vmatpush2.bf16.xpose.msra.mxu0 0
        %407 = vmatprep.subr.bf16.mxu0 0
        %408 = vmatpush2.bf16.xpose.msra.mxu0 0
        %409 = vmatprep.subr.bf16.mxu0 0
        %410 = vmatpush2.bf16.xpose.msra.mxu0 0
        %411 = vmatprep.subr.bf16.mxu0 0
        %412 = vmatpush2.bf16.xpose.msra.mxu0 0
        %413 = vmatprep.subr.bf16.mxu0 0
        %414 = vmatpush2.bf16.xpose.msra.mxu0 0
        %415 = vmatprep.subr.bf16.mxu0 0
        %416 = vmatpush2.bf16.xpose.msra.mxu0 0
        %417 = vmatprep.subr.bf16.mxu0 0
        %418 = vmatpush2.bf16.xpose.msra.mxu0 0
        %419 = vmatprep.subr.bf16.mxu0 0
        %420 = vmatpush2.bf16.xpose.msra.mxu0 0
        %421 = vmatprep.mubr.bf16.mxu0 0
        %422 = vmatmul.mubr.bf16.gmra.mxu0 %v384
        %v423 = vpop.f32.mrf.mxu0
        %v424 = vadd.f32 0.0, %v423
        %v425 = vpop.f32.mrf.mxu0
        %v426 = vpop.f32.mrf.mxu0
        %v427 = vpop.f32.mrf.mxu0
        %428 = vdwg.mxu0
        %v430 = vsel %vm336, %v326, 0
        %v433 = vsel %vm336, %v330, 0
        %435 = vmatprep.subr.bf16.mxu0 0
        %436 = vmatpush1.bf16.xpose.msra.mxu0 0
        %437 = vmatprep.subr.bf16.mxu0 0
        %438 = vmatpush1.bf16.xpose.msra.mxu0 0
        %439 = vmatprep.subr.bf16.mxu0 0
        %440 = vmatpush1.bf16.xpose.msra.mxu0 0
        %441 = vmatprep.subr.bf16.mxu0 0
        %442 = vmatpush1.bf16.xpose.msra.mxu0 0
        %443 = vmatprep.subr.bf16.mxu0 0
        %444 = vmatpush1.bf16.xpose.msra.mxu0 0
        %445 = vmatprep.subr.bf16.mxu0 0
        %446 = vmatpush1.bf16.xpose.msra.mxu0 0
        %447 = vmatprep.subr.bf16.mxu0 0
        %448 = vmatpush1.bf16.xpose.msra.mxu0 0
        %449 = vmatprep.subr.bf16.mxu0 0
        %450 = vmatpush1.bf16.xpose.msra.mxu0 %v433
        %451 = vmatprep.subr.bf16.mxu0 0
        %452 = vmatpush2.bf16.xpose.msra.mxu0 0
        %453 = vmatprep.subr.bf16.mxu0 0
        %454 = vmatpush2.bf16.xpose.msra.mxu0 0
        %455 = vmatprep.subr.bf16.mxu0 0
        %456 = vmatpush2.bf16.xpose.msra.mxu0 0
        %457 = vmatprep.subr.bf16.mxu0 0
        %458 = vmatpush2.bf16.xpose.msra.mxu0 0
        %459 = vmatprep.subr.bf16.mxu0 0
        %460 = vmatpush2.bf16.xpose.msra.mxu0 0
        %461 = vmatprep.subr.bf16.mxu0 0
        %462 = vmatpush2.bf16.xpose.msra.mxu0 0
        %463 = vmatprep.subr.bf16.mxu0 0
        %464 = vmatpush2.bf16.xpose.msra.mxu0 0
        %465 = vmatprep.subr.bf16.mxu0 0
        %466 = vmatpush2.bf16.xpose.msra.mxu0 0
        %467 = vmatprep.mubr.bf16.mxu0 0
        %468 = vmatmul.mubr.bf16.gmra.mxu0 %v430
        %v469 = vpop.f32.mrf.mxu0
        %v470 = vadd.f32 0.0, %v469
        %v471 = vpop.f32.mrf.mxu0
        %v472 = vpop.f32.mrf.mxu0
        %v473 = vpop.f32.mrf.mxu0
        %474 = vdwg.mxu0
        %v476 = vsel %vm336, %v327, 0
        %v479 = vsel %vm336, %v331, 0
        %481 = vmatprep.subr.bf16.mxu0 0
        %482 = vmatpush1.bf16.xpose.msra.mxu0 0
        %483 = vmatprep.subr.bf16.mxu0 0
        %484 = vmatpush1.bf16.xpose.msra.mxu0 0
        %485 = vmatprep.subr.bf16.mxu0 0
        %486 = vmatpush1.bf16.xpose.msra.mxu0 0
        %487 = vmatprep.subr.bf16.mxu0 0
        %488 = vmatpush1.bf16.xpose.msra.mxu0 0
        %489 = vmatprep.subr.bf16.mxu0 0
        %490 = vmatpush1.bf16.xpose.msra.mxu0 0
        %491 = vmatprep.subr.bf16.mxu0 0
        %492 = vmatpush1.bf16.xpose.msra.mxu0 0
        %493 = vmatprep.subr.bf16.mxu0 0
        %494 = vmatpush1.bf16.xpose.msra.mxu0 0
        %495 = vmatprep.subr.bf16.mxu0 0
        %496 = vmatpush1.bf16.xpose.msra.mxu0 %v479
        %497 = vmatprep.subr.bf16.mxu0 0
        %498 = vmatpush2.bf16.xpose.msra.mxu0 0
        %499 = vmatprep.subr.bf16.mxu0 0
        %500 = vmatpush2.bf16.xpose.msra.mxu0 0
        %501 = vmatprep.subr.bf16.mxu0 0
        %502 = vmatpush2.bf16.xpose.msra.mxu0 0
        %503 = vmatprep.subr.bf16.mxu0 0
        %504 = vmatpush2.bf16.xpose.msra.mxu0 0
        %505 = vmatprep.subr.bf16.mxu0 0
        %506 = vmatpush2.bf16.xpose.msra.mxu0 0
        %507 = vmatprep.subr.bf16.mxu0 0
        %508 = vmatpush2.bf16.xpose.msra.mxu0 0
        %509 = vmatprep.subr.bf16.mxu0 0
        %510 = vmatpush2.bf16.xpose.msra.mxu0 0
        %511 = vmatprep.subr.bf16.mxu0 0
        %512 = vmatpush2.bf16.xpose.msra.mxu0 0
        %513 = vmatprep.mubr.bf16.mxu0 0
        %514 = vmatmul.mubr.bf16.gmra.mxu0 %v476
        %v515 = vpop.f32.mrf.mxu0
        %v516 = vadd.f32 0.0, %v515
        %v517 = vpop.f32.mrf.mxu0
        %v518 = vpop.f32.mrf.mxu0
        %v519 = vpop.f32.mrf.mxu0
        %520 = vdwg.mxu0
        %s521 = smul.u32 %s33, 8
        %v522 = vlaneseq
        %v523 = vshrl.u32 %v522, 7
        %v524 = vstv %s521
        %v525 = vadd.s32 %v524, %v523
        %v526 = vlaneseq
        %v527 = vand.u32 %v526, 127
        %vm528 = vcmp.le.s32.totalorder %v527, %v525
        %v529 = vsel %vm528, 1, 0
        %vm530 = vcmp.eq.s32.totalorder %v529, 1
        %v531 = vsel %vm530, %v378, -2.3819763e+38
        %v532 = vsel %vm530, %v424, -2.3819763e+38
        %v533 = vsel %vm530, %v470, -2.3819763e+38
        %v534 = vsel %vm530, %v516, -2.3819763e+38
        %vm535 = vcmask 64512
        %v536 = vsel %vm535, %v531, -inf
        %537 = vmax.xlane.f32.xlu0 %v536
        %v538 = vpop.xlane.xlu0 %537
        %v539 = vsel %vm535, %v532, -inf
        %540 = vmax.xlane.f32.xlu0 %v539
        %v541 = vpop.xlane.xlu0 %540
        %v542 = vsel %vm535, %v533, -inf
        %543 = vmax.xlane.f32.xlu0 %v542
        %v544 = vpop.xlane.xlu0 %543
        %v545 = vsel %vm535, %v534, -inf
        %546 = vmax.xlane.f32.xlu0 %v545
        %v547 = vpop.xlane.xlu0 %546
        %v548 = vsub.f32 %v531, %v538
        %v549 = vsub.f32 %v532, %v541
        %v550 = vsub.f32 %v533, %v544
        %v551 = vsub.f32 %v534, %v547
        %v552 = vmul.f32 %v548, 1.442695
        %v553 = vpow.pop %v552
        %v554 = vmul.f32 %v549, 1.442695
        %v555 = vpow.pop %v554
        %v556 = vmul.f32 %v550, 1.442695
        %v557 = vpow.pop %v556
        %v558 = vmul.f32 %v551, 1.442695
        %v559 = vpow.pop %v558
        %v560 = vsel %vm535, %v553, 0.0
        %561 = vadd.xlane.f32.xlu0 %v560
        %v562 = vpop.xlane.xlu0 %561
        %v563 = vsel %vm535, %v555, 0.0
        %564 = vadd.xlane.f32.xlu0 %v563
        %v565 = vpop.xlane.xlu0 %564
        %v566 = vsel %vm535, %v557, 0.0
        %567 = vadd.xlane.f32.xlu0 %v566
        %v568 = vpop.xlane.xlu0 %567
        %v569 = vsel %vm535, %v559, 0.0
        %570 = vadd.xlane.f32.xlu0 %v569
        %v571 = vpop.xlane.xlu0 %570
        %v572 = vrcp.pop %v562
        %v573 = vrcp.pop %v565
        %v574 = vrcp.pop %v568
        %v575 = vrcp.pop %v571
        %v576 = vmul.f32 %v553, %v572
        %v577 = vmul.f32 %v555, %v573
        %v578 = vmul.f32 %v557, %v574
        %v579 = vmul.f32 %v559, %v575
        %v580 = vpack.c.bf16 %v576, %v576
        %v581 = vpack.c.bf16 %v577, %v577
        %v582 = vpack.c.bf16 %v578, %v578
        %v583 = vpack.c.bf16 %v579, %v579
        %v585 = vsel %vm535, %v580, 0
        %vm587 = vcmask 1043456
        %v589 = vsel %vm587, %v332, 0
        %591 = vmatprep.subr.bf16.mxu0 0
        %592 = vmatpush1.bf16.msra.mxu0 0
        %593 = vmatprep.subr.bf16.mxu0 0
        %594 = vmatpush1.bf16.msra.mxu0 0
        %595 = vmatprep.subr.bf16.mxu0 0
        %596 = vmatpush1.bf16.msra.mxu0 0
        %597 = vmatprep.subr.bf16.mxu0 0
        %598 = vmatpush1.bf16.msra.mxu0 0
        %599 = vmatprep.subr.bf16.mxu0 0
        %600 = vmatpush1.bf16.msra.mxu0 0
        %601 = vmatprep.subr.bf16.mxu0 0
        %602 = vmatpush1.bf16.msra.mxu0 0
        %603 = vmatprep.subr.bf16.mxu0 0
        %604 = vmatpush1.bf16.msra.mxu0 0
        %605 = vmatprep.subr.bf16.mxu0 0
        %606 = vmatpush1.bf16.msra.mxu0 %v589
        %607 = vmatprep.subr.bf16.mxu0 0
        %608 = vmatpush2.bf16.msra.mxu0 0
        %609 = vmatprep.subr.bf16.mxu0 0
        %610 = vmatpush2.bf16.msra.mxu0 0
        %611 = vmatprep.subr.bf16.mxu0 0
        %612 = vmatpush2.bf16.msra.mxu0 0
        %613 = vmatprep.subr.bf16.mxu0 0
        %614 = vmatpush2.bf16.msra.mxu0 0
        %615 = vmatprep.subr.bf16.mxu0 0
        %616 = vmatpush2.bf16.msra.mxu0 0
        %617 = vmatprep.subr.bf16.mxu0 0
        %618 = vmatpush2.bf16.msra.mxu0 0
        %619 = vmatprep.subr.bf16.mxu0 0
        %620 = vmatpush2.bf16.msra.mxu0 0
        %621 = vmatprep.subr.bf16.mxu0 0
        %622 = vmatpush2.bf16.msra.mxu0 0
        %623 = vmatprep.mubr.bf16.mxu0 0
        %624 = vmatmul.mubr.bf16.gmra.mxu0 %v585
        %v625 = vpop.f32.mrf.mxu0
        %v626 = vadd.f32 0.0, %v625
        %v627 = vpop.f32.mrf.mxu0
        %v628 = vpop.f32.mrf.mxu0
        %v629 = vpop.f32.mrf.mxu0
        %630 = vdwg.mxu0
        %v632 = vsel %vm535, %v581, 0
        %v635 = vsel %vm587, %v333, 0
        %637 = vmatprep.subr.bf16.mxu0 0
        %638 = vmatpush1.bf16.msra.mxu0 0
        %639 = vmatprep.subr.bf16.mxu0 0
        %640 = vmatpush1.bf16.msra.mxu0 0
        %641 = vmatprep.subr.bf16.mxu0 0
        %642 = vmatpush1.bf16.msra.mxu0 0
        %643 = vmatprep.subr.bf16.mxu0 0
        %644 = vmatpush1.bf16.msra.mxu0 0
        %645 = vmatprep.subr.bf16.mxu0 0
        %646 = vmatpush1.bf16.msra.mxu0 0
        %647 = vmatprep.subr.bf16.mxu0 0
        %648 = vmatpush1.bf16.msra.mxu0 0
        %649 = vmatprep.subr.bf16.mxu0 0
        %650 = vmatpush1.bf16.msra.mxu0 0
        %651 = vmatprep.subr.bf16.mxu0 0
        %652 = vmatpush1.bf16.msra.mxu0 %v635
        %653 = vmatprep.subr.bf16.mxu0 0
        %654 = vmatpush2.bf16.msra.mxu0 0
        %655 = vmatprep.subr.bf16.mxu0 0
        %656 = vmatpush2.bf16.msra.mxu0 0
        %657 = vmatprep.subr.bf16.mxu0 0
        %658 = vmatpush2.bf16.msra.mxu0 0
        %659 = vmatprep.subr.bf16.mxu0 0
        %660 = vmatpush2.bf16.msra.mxu0 0
        %661 = vmatprep.subr.bf16.mxu0 0
        %662 = vmatpush2.bf16.msra.mxu0 0
        %663 = vmatprep.subr.bf16.mxu0 0
        %664 = vmatpush2.bf16.msra.mxu0 0
        %665 = vmatprep.subr.bf16.mxu0 0
        %666 = vmatpush2.bf16.msra.mxu0 0
        %667 = vmatprep.subr.bf16.mxu0 0
        %668 = vmatpush2.bf16.msra.mxu0 0
        %669 = vmatprep.mubr.bf16.mxu0 0
        %670 = vmatmul.mubr.bf16.gmra.mxu0 %v632
        %v671 = vpop.f32.mrf.mxu0
        %v672 = vadd.f32 0.0, %v671
        %v673 = vpop.f32.mrf.mxu0
        %v674 = vpop.f32.mrf.mxu0
        %v675 = vpop.f32.mrf.mxu0
        %676 = vdwg.mxu0
        %v678 = vsel %vm535, %v582, 0
        %v681 = vsel %vm587, %v334, 0
        %683 = vmatprep.subr.bf16.mxu0 0
        %684 = vmatpush1.bf16.msra.mxu0 0
        %685 = vmatprep.subr.bf16.mxu0 0
        %686 = vmatpush1.bf16.msra.mxu0 0
        %687 = vmatprep.subr.bf16.mxu0 0
        %688 = vmatpush1.bf16.msra.mxu0 0
        %689 = vmatprep.subr.bf16.mxu0 0
        %690 = vmatpush1.bf16.msra.mxu0 0
        %691 = vmatprep.subr.bf16.mxu0 0
        %692 = vmatpush1.bf16.msra.mxu0 0
        %693 = vmatprep.subr.bf16.mxu0 0
        %694 = vmatpush1.bf16.msra.mxu0 0
        %695 = vmatprep.subr.bf16.mxu0 0
        %696 = vmatpush1.bf16.msra.mxu0 0
        %697 = vmatprep.subr.bf16.mxu0 0
        %698 = vmatpush1.bf16.msra.mxu0 %v681
        %699 = vmatprep.subr.bf16.mxu0 0
        %700 = vmatpush2.bf16.msra.mxu0 0
        %701 = vmatprep.subr.bf16.mxu0 0
        %702 = vmatpush2.bf16.msra.mxu0 0
        %703 = vmatprep.subr.bf16.mxu0 0
        %704 = vmatpush2.bf16.msra.mxu0 0
        %705 = vmatprep.subr.bf16.mxu0 0
        %706 = vmatpush2.bf16.msra.mxu0 0
        %707 = vmatprep.subr.bf16.mxu0 0
        %708 = vmatpush2.bf16.msra.mxu0 0
        %709 = vmatprep.subr.bf16.mxu0 0
        %710 = vmatpush2.bf16.msra.mxu0 0
        %711 = vmatprep.subr.bf16.mxu0 0
        %712 = vmatpush2.bf16.msra.mxu0 0
        %713 = vmatprep.subr.bf16.mxu0 0
        %714 = vmatpush2.bf16.msra.mxu0 0
        %715 = vmatprep.mubr.bf16.mxu0 0
        %716 = vmatmul.mubr.bf16.gmra.mxu0 %v678
        %v717 = vpop.f32.mrf.mxu0
        %v718 = vadd.f32 0.0, %v717
        %v719 = vpop.f32.mrf.mxu0
        %v720 = vpop.f32.mrf.mxu0
        %v721 = vpop.f32.mrf.mxu0
        %722 = vdwg.mxu0
        %v724 = vsel %vm535, %v583, 0
        %v727 = vsel %vm587, %v335, 0
        %729 = vmatprep.subr.bf16.mxu0 0
        %730 = vmatpush1.bf16.msra.mxu0 0
        %731 = vmatprep.subr.bf16.mxu0 0
        %732 = vmatpush1.bf16.msra.mxu0 0
        %733 = vmatprep.subr.bf16.mxu0 0
        %734 = vmatpush1.bf16.msra.mxu0 0
        %735 = vmatprep.subr.bf16.mxu0 0
        %736 = vmatpush1.bf16.msra.mxu0 0
        %737 = vmatprep.subr.bf16.mxu0 0
        %738 = vmatpush1.bf16.msra.mxu0 0
        %739 = vmatprep.subr.bf16.mxu0 0
        %740 = vmatpush1.bf16.msra.mxu0 0
        %741 = vmatprep.subr.bf16.mxu0 0
        %742 = vmatpush1.bf16.msra.mxu0 0
        %743 = vmatprep.subr.bf16.mxu0 0
        %744 = vmatpush1.bf16.msra.mxu0 %v727
        %745 = vmatprep.subr.bf16.mxu0 0
        %746 = vmatpush2.bf16.msra.mxu0 0
        %747 = vmatprep.subr.bf16.mxu0 0
        %748 = vmatpush2.bf16.msra.mxu0 0
        %749 = vmatprep.subr.bf16.mxu0 0
        %750 = vmatpush2.bf16.msra.mxu0 0
        %751 = vmatprep.subr.bf16.mxu0 0
        %752 = vmatpush2.bf16.msra.mxu0 0
        %753 = vmatprep.subr.bf16.mxu0 0
        %754 = vmatpush2.bf16.msra.mxu0 0
        %755 = vmatprep.subr.bf16.mxu0 0
        %756 = vmatpush2.bf16.msra.mxu0 0
        %757 = vmatprep.subr.bf16.mxu0 0
        %758 = vmatpush2.bf16.msra.mxu0 0
        %759 = vmatprep.subr.bf16.mxu0 0
        %760 = vmatpush2.bf16.msra.mxu0 0
        %761 = vmatprep.mubr.bf16.mxu0 0
        %762 = vmatmul.mubr.bf16.gmra.mxu0 %v724
        %v763 = vpop.f32.mrf.mxu0
        %v764 = vadd.f32 0.0, %v763
        %v765 = vpop.f32.mrf.mxu0
        %v766 = vpop.f32.mrf.mxu0
        %v767 = vpop.f32.mrf.mxu0
        %768 = vdwg.mxu0
        %769 = vst.msk [vmem:[%s315] sm:$0xff] %vm336, %v626
        %770 = vst.msk [vmem:[%s315 + $0x8] sm:$0xff] %vm336, %v672
        %771 = vst.msk [vmem:[%s315 + $0x10] sm:$0xff] %vm336, %v718
        %772 = vst.msk [vmem:[%s315 + $0x18] sm:$0xff] %vm336, %v764
        %773 = vst.msk [vmem:[%s322] sm:$0xff] %vm535, %v576
        %774 = vst.msk [vmem:[%s322 + $0x8] sm:$0xff] %vm535, %v577
        %775 = vst.msk [vmem:[%s322 + $0x10] sm:$0xff] %vm535, %v578
        %776 = vst.msk [vmem:[%s322 + $0x18] sm:$0xff] %vm535, %v579
        %s777 = sand.u32 %s130, 1
        %s778 = scalar_lea.sflag [#allocation4], %s777
        %s779 = sand.u32 %s130, 1
        %s780 = smul.addr %s779, 32
        %s781 = scalar_lea.vmem [#allocation8], %s780
        %s782 = sand.u32 %s158, 1
        %s783 = scalar_lea.sflag [#allocation10], %s782
        %s784 = sand.u32 %s158, 1
        %s785 = smul.addr %s784, 32
        %s786 = scalar_lea.vmem [#allocation9], %s785
        // Predicated region
        $region45: #{tpu_custom_call.1} parent=31 // pred_check
          %p787 = pneg %p140
        $region46: #{tpu_custom_call.1} parent=31 // pred_check_branch
          %789 = sbr.rel (%p787) target = $region48
        $region47: #{tpu_custom_call.1} parent=31 // pred_region
          %s791 = ssub.s32 512, 512
          %792 = vsyncadd %s778, %s791
          %s793 = smul.addr %s32, 4
          %s794 = sadd.s32 %s33, %s793
          %s795 = smul.addr %s794, 128
          %s796 = scalar_lea.hbm %s3, %s795
          %s797 = sshll.u32 %s781, 4
          %s798 = int_to_ptr.vmem [resolvable:$true] %s797
          %803 = dma.vmem_to_hbm [thread:$0]  %s798, 512, %s796, %s778, 128, 128, 8
        $region48: #{tpu_custom_call.1} parent=31 // pred_fallthru
          _
        // Predicated region
        $region49: #{tpu_custom_call.1} parent=31 // pred_check
          %p804 = pneg %p168
        $region50: #{tpu_custom_call.1} parent=31 // pred_check_branch
          %806 = sbr.rel (%p804) target = $region52
        $region51: #{tpu_custom_call.1} parent=31 // pred_region
          %s808 = ssub.s32 512, 512
          %809 = vsyncadd %s783, %s808
          %s810 = smul.addr %s32, 4
          %s811 = sadd.s32 %s33, %s810
          %s812 = smul.addr %s811, 128
          %s813 = scalar_lea.hbm %s4, %s812
          %s814 = sshll.u32 %s786, 4
          %s815 = int_to_ptr.vmem [resolvable:$true] %s814
          %820 = dma.vmem_to_hbm [thread:$0]  %s815, 512, %s813, %s783, 128, 128, 8
        $region52: #{tpu_custom_call.1} parent=31 // pred_fallthru
          _
      $region32: #{tpu_custom_call.1} parent=5 // pred_fallthru
        _
      %p821 = scmp.le.s32.totalorder 2, %s23
      // Predicated region
      $region53: #{tpu_custom_call.1} parent=5 // pred_check
        %p822 = pneg %p821
      $region54: #{tpu_custom_call.1} parent=5 // pred_check_branch
        %824 = sbr.rel (%p822) target = $region56
      $region55: #{tpu_custom_call.1} parent=5 // pred_region
        %s825 = ssub.s32 %s23, 2
        // Predicated region
        $region57: #{tpu_custom_call.1} parent=55 // pred_check
          %p826 = pneg %p146
        $region58: #{tpu_custom_call.1} parent=55 // pred_check_branch
          %828 = sbr.rel (%p826) target = $region60
        $region59: #{tpu_custom_call.1} parent=55 // pred_region
          %s829 = sand.u32 %s131, 1
          %s830 = scalar_lea.sflag [#allocation4], %s829
          %s831 = sand.u32 %s131, 1
          %s832 = smul.addr %s831, 32
          %s833 = scalar_lea.vmem [#allocation8], %s832
          %834 = dma.done %s830, 512
        $region60: #{tpu_custom_call.1} parent=55 // pred_fallthru
          _
        // Predicated region
        $region61: #{tpu_custom_call.1} parent=55 // pred_check
          %p835 = pneg %p174
        $region62: #{tpu_custom_call.1} parent=55 // pred_check_branch
          %837 = sbr.rel (%p835) target = $region64
        $region63: #{tpu_custom_call.1} parent=55 // pred_region
          %s838 = sand.u32 %s159, 1
          %s839 = scalar_lea.sflag [#allocation10], %s838
          %s840 = sand.u32 %s159, 1
          %s841 = smul.addr %s840, 32
          %s842 = scalar_lea.vmem [#allocation9], %s841
          %843 = dma.done %s839, 512
        $region64: #{tpu_custom_call.1} parent=55 // pred_fallthru
          _
      $region56: #{tpu_custom_call.1} parent=5 // pred_fallthru
        _
    $region6: #{tpu_custom_call.1} parent=1 // loop_footer
      %s27 = sadd.s32 1, %s23
    $region7: #{tpu_custom_call.1} parent=1 // loop_footer_branch
      %22 = sbr.rel target = $region3
    $region8: #{tpu_custom_call.1} parent=1 // loop_exit
      _
    %844 = vsyncpa [#allocation3], 1
    %s845 = scalar_lea.sflag [#allocation3], 1
    %846 = vsyncpa %s845, 1
    %847 = vsyncpa [#allocation6], 1
    %s848 = scalar_lea.sflag [#allocation6], 1
    %849 = vsyncpa %s848, 1
    %850 = vsyncpa [#allocation4], 1
    %s851 = scalar_lea.sflag [#allocation4], 1
    %852 = vsyncpa %s851, 1
    %853 = vsyncpa [#allocation10], 1
    %s854 = scalar_lea.sflag [#allocation10], 1
    %855 = vsyncpa %s854, 1

</llo_original>
